<compile_context>
chip_gen: v7x
topology: tpu7x:2x2x1
jax: 0.10.0
libtpu: 0.0.40
codegen_flags: <defaults>
</compile_context>

<pallas_src>
import math

import jax
import jax.numpy as jnp
from jax.experimental import pallas as pl
from jax.experimental.pallas import tpu as pltpu


# ----------------------------------------------------------------------------
# Materialize path A: direct HBM -> HBM DMA (no VMEM staging, no grid).
# ----------------------------------------------------------------------------
def _dma_copy_kernel(x_hbm, o_hbm, sem):
    cp = pltpu.make_async_copy(x_hbm, o_hbm, sem)
    cp.start()
    cp.wait()


def _pallas_copy_dma(x):
    nbytes = x.size * x.dtype.itemsize
    return pl.pallas_call(
        _dma_copy_kernel,
        out_shape=jax.ShapeDtypeStruct(x.shape, x.dtype),
        in_specs=[pl.BlockSpec(memory_space=pl.ANY)],
        out_specs=pl.BlockSpec(memory_space=pl.ANY),
        scratch_shapes=[pltpu.SemaphoreType.DMA(())],
        # Pure memory traffic: tell XLA's scheduler so it can overlap neighbors.
        cost_estimate=pl.CostEstimate(
            flops=0, transcendentals=0, bytes_accessed=2 * nbytes
        ),
    )(x)


# ----------------------------------------------------------------------------
# Materialize path B: tiled, pipelined VMEM copy (kept as a fusion skeleton).
# ----------------------------------------------------------------------------
def _copy_kernel(x_ref, o_ref):
    # Identity copy of one tile; BlockSpec double-buffering pipelines the
    # HBM<->VMEM DMAs across the grid.  Fuse elementwise compute here if needed.
    o_ref[...] = x_ref[...]


MAX_LANES = 2048                 # lane-dense target (multiple of 128)
TARGET_TILE_BYTES = 4 << 20      # ~4 MiB per tile, byte-constant across dtypes
VMEM_LIMIT_BYTES = 32 << 20      # explicit: portable v5e (16 MiB default) .. v7x


def _layout_2d(total, fallback_shape):
    """Batch-independent, lane-dense 2D factorization of the flat slab."""
    for cols in (2048, 1024, 512, 256, 128):
        if total % cols == 0:
            return total // cols, cols
    # Fall back to the logical shape; ragged boundary tiles handled by Pallas.
    return fallback_shape


def _pallas_copy_tiled(x):
    dtype = x.dtype
    itemsize = dtype.itemsize
    total = x.size

    B = x.shape[0]
    N = total // B if B else 0
    R, C = _layout_2d(total, (B, N))
    flat2d = x.reshape(R, C)  # contiguous row-major -> metadata-only reshape

    # Lane width: full C if it fits one lane-dense tile (full-dim block is
    # always legal), else 2048 lanes (multiple of 128) with a ragged last
    # column handled by masked stores on boundary tiles only.
    tile_n = C if C <= MAX_LANES else MAX_LANES

    # Byte-constant sublane count: ~TARGET_TILE_BYTES per tile, multiple of 8.
    bytes_per_row = max(1, tile_n * itemsize)
    tile_b = max(1, TARGET_TILE_BYTES // bytes_per_row)
    tile_b = max(8, (tile_b // 8) * 8)
    if tile_b >= R:
        tile_b = R  # full-dim block (always legal)

    grid = (pl.cdiv(R, tile_b), pl.cdiv(C, tile_n))
    nbytes = total * itemsize

    out = pl.pallas_call(
        _copy_kernel,
        out_shape=jax.ShapeDtypeStruct((R, C), dtype),
        grid_spec=pltpu.PrefetchScalarGridSpec(
            num_scalar_prefetch=0,
            grid=grid,
            in_specs=[pl.BlockSpec((tile_b, tile_n), lambda i, j: (i, j))],
            out_specs=pl.BlockSpec((tile_b, tile_n), lambda i, j: (i, j)),
        ),
        compiler_params=pltpu.CompilerParams(
            # Both axes independent -> sharded across the 2 TCs on v7x;
            # harmless (sequential grid) on single-TC v5e/v6e.
            dimension_semantics=("parallel", "parallel"),
            vmem_limit_bytes=VMEM_LIMIT_BYTES,
        ),
        cost_estimate=pl.CostEstimate(
            flops=0, transcendentals=0, bytes_accessed=2 * nbytes
        ),
    )(flat2d)

    return out


# ----------------------------------------------------------------------------
# Wrapper matching NnnReshape(*args).forward(x)
# ----------------------------------------------------------------------------
def _resolve_args(args, n_in):
    args = tuple(int(a) for a in args)
    if args.count(-1) > 1:
        raise ValueError("NnnReshape: at most one -1 dimension allowed")
    if -1 in args:
        known = math.prod(a for a in args if a != -1)
        if known <= 0 or n_in % known != 0:
            raise ValueError(
                f"NnnReshape: cannot infer -1 for {args} with {n_in} "
                f"elements per batch row"
            )
        args = tuple(n_in // known if a == -1 else a for a in args)
    else:
        n_out = math.prod(args) if args else 1
        if n_out != n_in:
            raise ValueError(
                f"NnnReshape: cannot view row of {n_in} elements as {args} "
                f"({n_out} elements)"
            )
    return args


def nnn_reshape(x, args, materialize=False, via="dma"):
    """Pallas/JAX equivalent of NnnReshape(*args).forward(x).

    x: array of shape (B, ...); result has shape (B,) + args.

    materialize=False (default): pure metadata reshape (zero HBM traffic),
    exactly matching torch.view semantics on a contiguous row-major tensor.
    materialize=True: route the data through a Pallas kernel that produces a
    physical copy — via="dma" (single HBM->HBM DMA, roofline bandwidth) or
    via="tiled" (grid-pipelined VMEM copy, useful only if compute is fused).
    """
    B = x.shape[0]
    n_in = math.prod(x.shape[1:]) if x.ndim > 1 else 1
    args = _resolve_args(args, n_in)
    out_shape = (B,) + args

    if not materialize:
        # Reshape is pure metadata in row-major layout == torch.view.
        return x.reshape(out_shape)

    if via == "dma":
        copied = _pallas_copy_dma(x)
        return copied.reshape(out_shape)
    elif via == "tiled":
        copied = _pallas_copy_tiled(x)
        return copied.reshape(out_shape)
    else:
        raise ValueError(f"unknown materialize path {via!r}")


if __name__ == "__main__":
    key = jax.random.PRNGKey(0)
    # Small NCHW input, matching a typical use of NnnReshape.
    B, C, H, W = 2, 4, 16, 16
    x = jax.random.normal(key, (B, C, H, W), dtype=jnp.float32)

    # Target shape (excluding batch): (16, 64) -- 4*16*16 == 16*64.
    args = (16, 64)
    ref = x.reshape((B,) + args)

    # Default fast path: metadata-only reshape (the recommended production path).
    y_fast = jax.block_until_ready(nnn_reshape(x, args))
    assert y_fast.shape == (B,) + args and y_fast.dtype == x.dtype
    assert bool(jnp.array_equal(y_fast, ref))

    # Materialized path A: single HBM->HBM DMA.
    y_dma = jax.block_until_ready(nnn_reshape(x, args, materialize=True, via="dma"))
    assert y_dma.shape == (B,) + args and y_dma.dtype == x.dtype
    assert bool(jnp.array_equal(y_dma, ref))

    # Materialized path B: batch-independent tiled VMEM copy (fusion skeleton).
    y_tiled = jax.block_until_ready(nnn_reshape(x, args, materialize=True, via="tiled"))
    assert y_tiled.shape == (B,) + args and y_tiled.dtype == x.dtype
    assert bool(jnp.array_equal(y_tiled, ref))

    # Also exercise -1 inference (torch.view allows it).
    y_infer = jax.block_until_ready(nnn_reshape(x, (16, -1)))
    assert y_infer.shape == (B, 16, 64)
    assert bool(jnp.array_equal(y_infer, ref))

    print("KERNEL_OK")
</pallas_src>

<mosaic_0001>
module attributes {stable_mosaic.version = 11 : i64} {
  func.func @_dma_copy_kernel(%arg0: memref<2x4x16x16xf32, #tpu.memory_space<any>>, %arg1: memref<2x4x16x16xf32, #tpu.memory_space<any>>, %arg2: memref<!tpu.dma_semaphore, #tpu.memory_space<semaphore_mem>>) attributes {dimension_semantics = [], scalar_prefetch = 0 : i64, scratch_operands = 1 : i64, tpu.core_type = #tpu.core_type<tc>} {
    tpu.enqueue_dma source(%arg0 : memref<2x4x16x16xf32, #tpu.memory_space<any>>) target(%arg1 : memref<2x4x16x16xf32, #tpu.memory_space<any>>) target_semaphore(%arg2 : memref<!tpu.dma_semaphore, #tpu.memory_space<semaphore_mem>>)
    tpu.wait_dma2 semaphore(%arg2 : memref<!tpu.dma_semaphore, #tpu.memory_space<semaphore_mem>>) src(%arg0 : memref<2x4x16x16xf32, #tpu.memory_space<any>>) dst(%arg1 : memref<2x4x16x16xf32, #tpu.memory_space<any>>)
    return
  }
}

</mosaic_0001>

<llo_original>
// kernel: tpu_custom_call.1
$region0: #{tpu_custom_call.1}
  #allocation0 [shape = 'u32[]', space=smem, size = 0x4, offset = 0x4, fixed_abs, tag = 'smem constant byte address 0x4 - core index']
  #allocation1 [shape = 'u32[144,128]{1,0:T(1,128)}', space=vmem, size = 0x12000, scoped, tag = 'internal scratch']
  #allocation2 [shape = 's32[1]{0}', space=sflag, size = 0x4, scoped, tag = 'scratch operand']
  #allocation3 [shape = 's32[]', space=sflag, size = 0x4, offset = 0, fixed_abs, tag = 'sflag constant byte address 0x0 - dummy sync flag']
  #allocation4 [shape = 'u32[0]{0}', space=smem, size = 0, offset = 0, fixed_abs, tag = 'smem constant byte address 0x0 - null']
  %s0 = inlined_call_operand.hbm [shape: f32[2,4,16,16], index: 0, kind: input, shape index: {}]
  %s1 = inlined_call_operand.hbm [shape: f32[2,4,16,16], index: 1, kind: output, shape index: {}]
  %s2 = sld [smem:[#allocation0]]
  $region2: #{tpu_custom_call.1} parent=0
    _
  %s4 = ssub.s32 1, %s2
  %s5 = scalar_select 0, %s4, %s2
  %s7 = sshll.u32 1, 14
  %s8 = sxor.u32 4294967295, %s7
  %s11 = sshll.u32 3, 24
  %s12 = sxor.u32 4294967295, %s11
  %s13 = sand.u32 0, %s12
  %s15 = sor.u32 %s13, 0
  %18 = dma.general %s0, 2048, %s1, [#allocation2], [#allocation3], [#allocation4], %s15, 0
  %s19 = smul.u32 2, 4
  %s20 = smul.u32 %s19, 16
  %s21 = smul.u32 %s20, 1
  %s22 = sshll.u32 %s21, 4
  %23 = dma.done [#allocation2], %s22
  %24 = vsyncmov [#allocation2]
  %s25 = vpop.sfrf %24
  %p26 = scmp.eq.s32.totalorder %s25, 0
  %p27 = pneg %p26
  %29 = shalt.err (%p27)

</llo_original>
